<compile_context>
chip_gen: v6e
topology: v6e:2x2x1
jax: 0.10.0
libtpu: 0.0.40
codegen_flags: <defaults>
</compile_context>

<pallas_src>
import jax
import jax.numpy as jnp
from jax import lax
from jax.experimental import pallas as pl
from jax.experimental.pallas import tpu as pltpu

EPS = 1e-5


def basic_block_kernel(x_ref, w1_ref, w2_ref, p_ref, o_ref):
    x = x_ref[...]                                # (N, H) f32
    n_inv = 1.0 / x.shape[0]

    p = p_ref[...]                                # (4, H) packed BN params, f32
    g1, be1 = p[0:1, :], p[1:2, :]
    g2, be2 = p[2:3, :], p[3:4, :]

    def linear(a, w_ref):
        # Matmul operands in the (pre-cast) weight dtype — bf16 by default,
        # MXU-native on v5e/v6e/v7x — with f32 accumulation.
        return jnp.dot(a.astype(w_ref.dtype), w_ref[...],
                       preferred_element_type=jnp.float32)

    def bn_relu(h, g, be):
        # Training-mode BatchNorm1d: biased variance, two-pass for stability.
        mean = jnp.sum(h, axis=0, keepdims=True) * n_inv        # (1, H)
        c = h - mean
        var = jnp.sum(c * c, axis=0, keepdims=True) * n_inv     # (1, H)
        scale = g * lax.rsqrt(var + EPS)                        # (1, H)
        return jnp.maximum(c * scale + be, 0.0)

    # Dropout p=0.0 -> identity.
    h = bn_relu(linear(x, w1_ref), g1, be1)       # linear1 -> bn1 -> relu
    h = bn_relu(linear(h, w2_ref), g2, be2)       # linear2 -> bn2 -> relu
    o_ref[...] = jnp.maximum(h + x, 0.0)          # residual + relu


def prepare_block_params(w1, b1, g1, be1, w2, b2, g2, be2, *,
                         matmul_dtype=jnp.bfloat16):
    """One-time parameter prep (hoisted out of the per-call hot path).

    Weights arrive in PyTorch Linear (out, in) layout; they are transposed to
    (in, out) and cast to the MXU operand dtype once.  The linear biases are
    exactly cancelled by the training-mode BatchNorm mean subtraction, so they
    are dropped here.
    """
    del b1, b2
    w1t = jnp.asarray(w1).T.astype(matmul_dtype)                 # (H, H)
    w2t = jnp.asarray(w2).T.astype(matmul_dtype)                 # (H, H)
    params = jnp.stack([g1, be1, g2, be2], axis=0).astype(jnp.float32)  # (4, H)
    return w1t, w2t, params


def basic_block_apply(x, w1t, w2t, params):
    """x: (N, H) f32; w*t: (H, H) pre-transposed/cast; params: (4, H) f32."""
    N, H = x.shape
    footprint = (x.size * 4 + w1t.size * w1t.dtype.itemsize
                 + w2t.size * w2t.dtype.itemsize + params.size * 4 + N * H * 4)
    vmem_limit = int(min(max(8 * 1024 * 1024, 4 * footprint), 48 * 1024 * 1024))

    return pl.pallas_call(
        basic_block_kernel,
        out_shape=jax.ShapeDtypeStruct((N, H), jnp.float32),
        in_specs=[
            pl.BlockSpec(memory_space=pltpu.MemorySpace.VMEM),   # x
            pl.BlockSpec(memory_space=pltpu.MemorySpace.VMEM),   # W1^T
            pl.BlockSpec(memory_space=pltpu.MemorySpace.VMEM),   # W2^T
            pl.BlockSpec(memory_space=pltpu.MemorySpace.VMEM),   # packed BN params
        ],
        out_specs=pl.BlockSpec(memory_space=pltpu.MemorySpace.VMEM),
        compiler_params=pltpu.CompilerParams(vmem_limit_bytes=vmem_limit),
    )(x, w1t, w2t, params)


def basic_block(x, w1, b1, g1, be1, w2, b2, g2, be2, *,
                matmul_dtype=jnp.bfloat16):
    """Convenience wrapper: prep + apply (prefer calling prep once yourself)."""
    w1t, w2t, params = prepare_block_params(
        w1, b1, g1, be1, w2, b2, g2, be2, matmul_dtype=matmul_dtype)
    return basic_block_apply(x, w1t, w2t, params)


def reference(x, w1, b1, g1, be1, w2, b2, g2, be2):
    """Pure-JAX reference with exact PyTorch-module semantics (f32, biases kept)."""
    def bn(h, g, be):
        m = h.mean(axis=0, keepdims=True)
        v = ((h - m) ** 2).mean(axis=0, keepdims=True)
        return (h - m) / jnp.sqrt(v + EPS) * g + be
    h = jnp.maximum(bn(x @ w1.T + b1, g1, be1), 0.0)
    h = jnp.maximum(bn(h @ w2.T + b2, g2, be2), 0.0)
    return jnp.maximum(h + x, 0.0)


if __name__ == "__main__":
    # Lane/sublane-aligned small demo: hidden = 128 (one full lane width),
    # batch = 128 rows.
    N, H = 128, 128
    key = jax.random.PRNGKey(0)
    ks = jax.random.split(key, 7)
    bound = 1.0 / jnp.sqrt(H)

    x = jax.random.normal(ks[0], (N, H), dtype=jnp.float32)
    w1 = jax.random.uniform(ks[1], (H, H), jnp.float32, -bound, bound)
    b1 = jax.random.uniform(ks[2], (H,), jnp.float32, -bound, bound)
    w2 = jax.random.uniform(ks[3], (H, H), jnp.float32, -bound, bound)
    b2 = jax.random.uniform(ks[4], (H,), jnp.float32, -bound, bound)
    # BatchNorm affine params (PyTorch default gamma=1, beta=0; perturb gamma
    # so the affine path is exercised).
    g1 = 1.0 + 0.1 * jax.random.normal(ks[5], (H,), jnp.float32)
    be1 = jnp.zeros((H,), jnp.float32)
    g2 = 1.0 + 0.1 * jax.random.normal(ks[6], (H,), jnp.float32)
    be2 = jnp.zeros((H,), jnp.float32)

    ref = reference(x, w1, b1, g1, be1, w2, b2, g2, be2)

    # f32 matmul-operand path: tight match against the module semantics.
    w1t_f32, w2t_f32, params = prepare_block_params(
        w1, b1, g1, be1, w2, b2, g2, be2, matmul_dtype=jnp.float32)
    out_f32 = jax.block_until_ready(basic_block_apply(x, w1t_f32, w2t_f32, params))
    assert out_f32.shape == (N, H)
    assert jnp.allclose(out_f32, ref, atol=1e-4, rtol=1e-4), "f32 mismatch vs reference"

    # Default bf16 matmul-operand path (MXU-native on v5e/v6e/v7x); BN /
    # residual / activation math stays f32.
    w1t, w2t, params = prepare_block_params(
        w1, b1, g1, be1, w2, b2, g2, be2)            # bf16 default
    out = jax.block_until_ready(basic_block_apply(x, w1t, w2t, params))
    assert out.shape == (N, H)
    assert jnp.allclose(out, ref, atol=5e-2, rtol=5e-2), "bf16 mismatch vs reference"

    print("KERNEL_OK")
</pallas_src>

<mosaic_0001>
module attributes {stable_mosaic.version = 11 : i64} {
  func.func @basic_block_kernel(%arg0: memref<128x128xf32, #tpu.memory_space<vmem>>, %arg1: memref<128x128xf32, #tpu.memory_space<vmem>>, %arg2: memref<128x128xf32, #tpu.memory_space<vmem>>, %arg3: memref<4x128xf32, #tpu.memory_space<vmem>>, %arg4: memref<128x128xf32, #tpu.memory_space<vmem>>) attributes {dimension_semantics = [], scalar_prefetch = 0 : i64, scratch_operands = 0 : i64, tpu.core_type = #tpu.core_type<tc>} {
    %c0 = arith.constant 0 : index
    %c0_0 = arith.constant 0 : index
    %0 = vector.load %arg0[%c0, %c0_0] : memref<128x128xf32, #tpu.memory_space<vmem>>, vector<128x128xf32>
    %c0_1 = arith.constant 0 : index
    %c0_2 = arith.constant 0 : index
    %1 = vector.load %arg3[%c0_1, %c0_2] : memref<4x128xf32, #tpu.memory_space<vmem>>, vector<4x128xf32>
    %2 = vector.extract_strided_slice %1 {offsets = [0, 0], sizes = [1, 128], strides = [1, 1]} : vector<4x128xf32> to vector<1x128xf32>
    %3 = vector.extract_strided_slice %1 {offsets = [1, 0], sizes = [1, 128], strides = [1, 1]} : vector<4x128xf32> to vector<1x128xf32>
    %4 = vector.extract_strided_slice %1 {offsets = [2, 0], sizes = [1, 128], strides = [1, 1]} : vector<4x128xf32> to vector<1x128xf32>
    %5 = vector.extract_strided_slice %1 {offsets = [3, 0], sizes = [1, 128], strides = [1, 1]} : vector<4x128xf32> to vector<1x128xf32>
    %c0_3 = arith.constant 0 : index
    %c0_4 = arith.constant 0 : index
    %6 = vector.load %arg1[%c0_3, %c0_4] : memref<128x128xf32, #tpu.memory_space<vmem>>, vector<128x128xf32>
    %cst = arith.constant dense<0.000000e+00> : vector<128x128xf32>
    %7 = tpu.matmul %0, %6, %cst {dimension_numbers = #tpu.dot_dimension_numbers<[1], [0], [0], [1], [0, 0, 1, 1], [], []>} : vector<128x128xf32>, vector<128x128xf32>, vector<128x128xf32> -> vector<128x128xf32>
    %cst_5 = arith.constant dense<0.000000e+00> : vector<128xf32>
    %8 = vector.multi_reduction <add>, %7, %cst_5 [0] : vector<128x128xf32> to vector<128xf32>
    %9 = vector.shape_cast %8 : vector<128xf32> to vector<1x128xf32>
    %cst_6 = arith.constant 7.812500e-03 : f32
    %10 = vector.broadcast %cst_6 : f32 to vector<1x128xf32>
    %11 = arith.mulf %9, %10 : vector<1x128xf32>
    %12 = vector.broadcast %11 : vector<1x128xf32> to vector<128x128xf32>
    %13 = arith.subf %7, %12 : vector<128x128xf32>
    %14 = arith.mulf %13, %13 : vector<128x128xf32>
    %cst_7 = arith.constant dense<0.000000e+00> : vector<128xf32>
    %15 = vector.multi_reduction <add>, %14, %cst_7 [0] : vector<128x128xf32> to vector<128xf32>
    %16 = vector.shape_cast %15 : vector<128xf32> to vector<1x128xf32>
    %cst_8 = arith.constant 7.812500e-03 : f32
    %17 = vector.broadcast %cst_8 : f32 to vector<1x128xf32>
    %18 = arith.mulf %16, %17 : vector<1x128xf32>
    %cst_9 = arith.constant 9.99999974E-6 : f32
    %19 = vector.broadcast %cst_9 : f32 to vector<1x128xf32>
    %20 = arith.addf %18, %19 : vector<1x128xf32>
    %21 = math.rsqrt %20 : vector<1x128xf32>
    %22 = arith.mulf %2, %21 : vector<1x128xf32>
    %23 = vector.broadcast %22 : vector<1x128xf32> to vector<128x128xf32>
    %24 = arith.mulf %13, %23 : vector<128x128xf32>
    %25 = vector.broadcast %3 : vector<1x128xf32> to vector<128x128xf32>
    %26 = arith.addf %24, %25 : vector<128x128xf32>
    %cst_10 = arith.constant 0.000000e+00 : f32
    %27 = vector.broadcast %cst_10 : f32 to vector<128x128xf32>
    %28 = arith.maximumf %26, %27 : vector<128x128xf32>
    %c0_11 = arith.constant 0 : index
    %c0_12 = arith.constant 0 : index
    %29 = vector.load %arg2[%c0_11, %c0_12] : memref<128x128xf32, #tpu.memory_space<vmem>>, vector<128x128xf32>
    %cst_13 = arith.constant dense<0.000000e+00> : vector<128x128xf32>
    %30 = tpu.matmul %28, %29, %cst_13 {dimension_numbers = #tpu.dot_dimension_numbers<[1], [0], [0], [1], [0, 0, 1, 1], [], []>} : vector<128x128xf32>, vector<128x128xf32>, vector<128x128xf32> -> vector<128x128xf32>
    %cst_14 = arith.constant dense<0.000000e+00> : vector<128xf32>
    %31 = vector.multi_reduction <add>, %30, %cst_14 [0] : vector<128x128xf32> to vector<128xf32>
    %32 = vector.shape_cast %31 : vector<128xf32> to vector<1x128xf32>
    %cst_15 = arith.constant 7.812500e-03 : f32
    %33 = vector.broadcast %cst_15 : f32 to vector<1x128xf32>
    %34 = arith.mulf %32, %33 : vector<1x128xf32>
    %35 = vector.broadcast %34 : vector<1x128xf32> to vector<128x128xf32>
    %36 = arith.subf %30, %35 : vector<128x128xf32>
    %37 = arith.mulf %36, %36 : vector<128x128xf32>
    %cst_16 = arith.constant dense<0.000000e+00> : vector<128xf32>
    %38 = vector.multi_reduction <add>, %37, %cst_16 [0] : vector<128x128xf32> to vector<128xf32>
    %39 = vector.shape_cast %38 : vector<128xf32> to vector<1x128xf32>
    %cst_17 = arith.constant 7.812500e-03 : f32
    %40 = vector.broadcast %cst_17 : f32 to vector<1x128xf32>
    %41 = arith.mulf %39, %40 : vector<1x128xf32>
    %cst_18 = arith.constant 9.99999974E-6 : f32
    %42 = vector.broadcast %cst_18 : f32 to vector<1x128xf32>
    %43 = arith.addf %41, %42 : vector<1x128xf32>
    %44 = math.rsqrt %43 : vector<1x128xf32>
    %45 = arith.mulf %4, %44 : vector<1x128xf32>
    %46 = vector.broadcast %45 : vector<1x128xf32> to vector<128x128xf32>
    %47 = arith.mulf %36, %46 : vector<128x128xf32>
    %48 = vector.broadcast %5 : vector<1x128xf32> to vector<128x128xf32>
    %49 = arith.addf %47, %48 : vector<128x128xf32>
    %cst_19 = arith.constant 0.000000e+00 : f32
    %50 = vector.broadcast %cst_19 : f32 to vector<128x128xf32>
    %51 = arith.maximumf %49, %50 : vector<128x128xf32>
    %52 = arith.addf %51, %0 : vector<128x128xf32>
    %cst_20 = arith.constant 0.000000e+00 : f32
    %53 = vector.broadcast %cst_20 : f32 to vector<128x128xf32>
    %54 = arith.maximumf %52, %53 : vector<128x128xf32>
    %c0_21 = arith.constant 0 : index
    %c0_22 = arith.constant 0 : index
    %55 = vector.load %arg4[%c0_21, %c0_22] : memref<128x128xf32, #tpu.memory_space<vmem>>, vector<128x128xf32>
    tpu.vector_store %arg4[%c0_21, %c0_22], %54 {strides = array<i32>} : memref<128x128xf32, #tpu.memory_space<vmem>>, vector<128x128xf32>,
    return
  }
}

</mosaic_0001>

<llo_original>
// kernel: tpu_custom_call.1
$region0: #{tpu_custom_call.1}
  #allocation0 [shape = 'u32[]', space=smem, size = 0x4, offset = 0x4, fixed_abs, tag = 'smem constant byte address 0x4 - core index']
  #allocation1 [shape = 'u32[144,128]{1,0:T(1,128)}', space=vmem, size = 0x12000, scoped, tag = 'internal scratch']
  %s0 = inlined_call_operand.hbm [shape: f32[128,128], index: 0, kind: input, shape index: {}]
  %s1 = inlined_call_operand.hbm [shape: f32[128,128], index: 1, kind: input, shape index: {}]
  %s2 = inlined_call_operand.hbm [shape: f32[128,128], index: 2, kind: input, shape index: {}]
  %s3 = inlined_call_operand.vmem [shape: f32[4,128], index: 3, kind: input, shape index: {}]
  %s4 = inlined_call_operand.hbm [shape: f32[128,128], index: 4, kind: output, shape index: {}]
  %s5 = sld [smem:[#allocation0]]
  $region38: #{tpu_custom_call.1} parent=0
    _
  %s7 = ssub.s32 1, %s5
  %s8 = scalar_select 0, %s7, %s5
  $region1: #{tpu_custom_call.1} parent=0
    #allocation2 [shape = 'u8[65536]{0}', space=vmem, size = 0x10000, scoped, tag = 'input window, operand 0, single buffered']
    #allocation3 [shape = 's32[1]{0}', space=sflag, size = 0x4, scoped, tag = 'scoped memory for tpu_custom_call.1']
    #allocation4 [shape = 's32[1]{0}', space=sflag, size = 0x4, scoped, tag = 'scoped memory for tpu_custom_call.1']
    #allocation5 [shape = 'u8[65536]{0}', space=vmem, size = 0x10000, scoped, tag = 'input window, operand 1, single buffered']
    #allocation6 [shape = 's32[1]{0}', space=sflag, size = 0x4, scoped, tag = 'scoped memory for tpu_custom_call.1']
    #allocation7 [shape = 'u8[65536]{0}', space=vmem, size = 0x10000, scoped, tag = 'input window, operand 2, single buffered']
    #allocation8 [shape = 'u8[65536]{0}', space=vmem, size = 0x10000, scoped, tag = 'output window, operand 0, single buffered']
    %9 = vsyncpa [#allocation3], 0
    %10 = vsyncpa [#allocation6], 0
    %11 = vsyncpa [#allocation4], 0
    // Predicated region
    $region2: #{tpu_custom_call.1} parent=1 // pred_check
      _
    $region3: #{tpu_custom_call.1} parent=1 // pred_check_branch
      %13 = sbr.rel (0) target = $region5
    $region4: #{tpu_custom_call.1} parent=1 // pred_region
      %s15 = ssub.s32 2048, 2048
      %16 = vsyncadd [#allocation3], %s15
      %s17 = sshll.u32 [#allocation2], 4
      %s18 = int_to_ptr.vmem [resolvable:$true] %s17
      %23 = dma.hbm_to_vmem [thread:$0]  %s0, 2048, %s18, [#allocation3], 128, 128, 8
    $region5: #{tpu_custom_call.1} parent=1 // pred_fallthru
      _
    // Predicated region
    $region6: #{tpu_custom_call.1} parent=1 // pred_check
      _
    $region7: #{tpu_custom_call.1} parent=1 // pred_check_branch
      %25 = sbr.rel (0) target = $region9
    $region8: #{tpu_custom_call.1} parent=1 // pred_region
      %s27 = ssub.s32 2048, 2048
      %28 = vsyncadd [#allocation6], %s27
      %s29 = sshll.u32 [#allocation5], 4
      %s30 = int_to_ptr.vmem [resolvable:$true] %s29
      %35 = dma.hbm_to_vmem [thread:$0]  %s1, 2048, %s30, [#allocation6], 128, 128, 8
    $region9: #{tpu_custom_call.1} parent=1 // pred_fallthru
      _
    // Predicated region
    $region10: #{tpu_custom_call.1} parent=1 // pred_check
      _
    $region11: #{tpu_custom_call.1} parent=1 // pred_check_branch
      %37 = sbr.rel (0) target = $region13
    $region12: #{tpu_custom_call.1} parent=1 // pred_region
      %s39 = ssub.s32 2048, 2048
      %40 = vsyncadd [#allocation6], %s39
      %s41 = sshll.u32 [#allocation7], 4
      %s42 = int_to_ptr.vmem [resolvable:$true] %s41
      %47 = dma.hbm_to_vmem [thread:$0]  %s2, 2048, %s42, [#allocation6], 128, 128, 8
    $region13: #{tpu_custom_call.1} parent=1 // pred_fallthru
      _
    // Predicated region
    $region14: #{tpu_custom_call.1} parent=1 // pred_check
      _
    $region15: #{tpu_custom_call.1} parent=1 // pred_check_branch
      %49 = sbr.rel (0) target = $region17
    $region16: #{tpu_custom_call.1} parent=1 // pred_region
      _
    $region17: #{tpu_custom_call.1} parent=1 // pred_fallthru
      _
    // Predicated region
    $region18: #{tpu_custom_call.1} parent=1 // pred_check
      _
    $region19: #{tpu_custom_call.1} parent=1 // pred_check_branch
      %51 = sbr.rel (0) target = $region21
    $region20: #{tpu_custom_call.1} parent=1 // pred_region
      %52 = dma.done [#allocation3], 2048
    $region21: #{tpu_custom_call.1} parent=1 // pred_fallthru
      _
    // Predicated region
    $region22: #{tpu_custom_call.1} parent=1 // pred_check
      _
    $region23: #{tpu_custom_call.1} parent=1 // pred_check_branch
      %54 = sbr.rel (0) target = $region25
    $region24: #{tpu_custom_call.1} parent=1 // pred_region
      %55 = dma.done [#allocation6], 2048
    $region25: #{tpu_custom_call.1} parent=1 // pred_fallthru
      _
    // Predicated region
    $region26: #{tpu_custom_call.1} parent=1 // pred_check
      _
    $region27: #{tpu_custom_call.1} parent=1 // pred_check_branch
      %57 = sbr.rel (0) target = $region29
    $region28: #{tpu_custom_call.1} parent=1 // pred_region
      %58 = dma.done [#allocation6], 2048
    $region29: #{tpu_custom_call.1} parent=1 // pred_fallthru
      _
    %v59 = vld [vmem:[#allocation2] sm:$0xff]
    %v60 = vld [vmem:[#allocation2 + $0x8] sm:$0xff]
    %v61 = vld [vmem:[#allocation2 + $0x10] sm:$0xff]
    %v62 = vld [vmem:[#allocation2 + $0x18] sm:$0xff]
    %v63 = vld [vmem:[#allocation2 + $0x20] sm:$0xff]
    %v64 = vld [vmem:[#allocation2 + $0x28] sm:$0xff]
    %v65 = vld [vmem:[#allocation2 + $0x30] sm:$0xff]
    %v66 = vld [vmem:[#allocation2 + $0x38] sm:$0xff]
    %v67 = vld [vmem:[#allocation2 + $0x40] sm:$0xff]
    %v68 = vld [vmem:[#allocation2 + $0x48] sm:$0xff]
    %v69 = vld [vmem:[#allocation2 + $0x50] sm:$0xff]
    %v70 = vld [vmem:[#allocation2 + $0x58] sm:$0xff]
    %v71 = vld [vmem:[#allocation2 + $0x60] sm:$0xff]
    %v72 = vld [vmem:[#allocation2 + $0x68] sm:$0xff]
    %v73 = vld [vmem:[#allocation2 + $0x70] sm:$0xff]
    %v74 = vld [vmem:[#allocation2 + $0x78] sm:$0xff]
    %v75 = vld [vmem:[%s3] sm:$0xf]
    %v76 = vld [vmem:[#allocation5] sm:$0xff]
    %v77 = vld [vmem:[#allocation5 + $0x8] sm:$0xff]
    %v78 = vld [vmem:[#allocation5 + $0x10] sm:$0xff]
    %v79 = vld [vmem:[#allocation5 + $0x18] sm:$0xff]
    %v80 = vld [vmem:[#allocation5 + $0x20] sm:$0xff]
    %v81 = vld [vmem:[#allocation5 + $0x28] sm:$0xff]
    %v82 = vld [vmem:[#allocation5 + $0x30] sm:$0xff]
    %v83 = vld [vmem:[#allocation5 + $0x38] sm:$0xff]
    %v84 = vld [vmem:[#allocation5 + $0x40] sm:$0xff]
    %v85 = vld [vmem:[#allocation5 + $0x48] sm:$0xff]
    %v86 = vld [vmem:[#allocation5 + $0x50] sm:$0xff]
    %v87 = vld [vmem:[#allocation5 + $0x58] sm:$0xff]
    %v88 = vld [vmem:[#allocation5 + $0x60] sm:$0xff]
    %v89 = vld [vmem:[#allocation5 + $0x68] sm:$0xff]
    %v90 = vld [vmem:[#allocation5 + $0x70] sm:$0xff]
    %v91 = vld [vmem:[#allocation5 + $0x78] sm:$0xff]
    %92 = vmatprep.subr.mxu0 0.0
    %93 = vmatpush1.msra.mxu0 %v91
    %94 = vmatprep.subr.mxu0 0.0
    %95 = vmatpush1.msra.mxu0 %v90
    %96 = vmatprep.subr.mxu0 0.0
    %97 = vmatpush1.msra.mxu0 %v89
    %98 = vmatprep.subr.mxu0 0.0
    %99 = vmatpush1.msra.mxu0 %v88
    %100 = vmatprep.subr.mxu0 0.0
    %101 = vmatpush1.msra.mxu0 %v87
    %102 = vmatprep.subr.mxu0 0.0
    %103 = vmatpush1.msra.mxu0 %v86
    %104 = vmatprep.subr.mxu0 0.0
    %105 = vmatpush1.msra.mxu0 %v85
    %106 = vmatprep.subr.mxu0 0.0
    %107 = vmatpush1.msra.mxu0 %v84
    %108 = vmatprep.subr.mxu0 0.0
    %109 = vmatpush1.msra.mxu0 %v83
    %110 = vmatprep.subr.mxu0 0.0
    %111 = vmatpush1.msra.mxu0 %v82
    %112 = vmatprep.subr.mxu0 0.0
    %113 = vmatpush1.msra.mxu0 %v81
    %114 = vmatprep.subr.mxu0 0.0
    %115 = vmatpush1.msra.mxu0 %v80
    %116 = vmatprep.subr.mxu0 0.0
    %117 = vmatpush1.msra.mxu0 %v79
    %118 = vmatprep.subr.mxu0 0.0
    %119 = vmatpush1.msra.mxu0 %v78
    %120 = vmatprep.subr.mxu0 0.0
    %121 = vmatpush1.msra.mxu0 %v77
    %122 = vmatprep.subr.mxu0 0.0
    %123 = vmatpush1.msra.mxu0 %v76
    %124 = vmatprep.subr.mxu0 0.0
    %125 = vmatpush2.msra.mxu0 0.0
    %126 = vmatprep.subr.mxu0 0.0
    %127 = vmatpush2.msra.mxu0 0.0
    %128 = vmatprep.subr.mxu0 0.0
    %129 = vmatpush2.msra.mxu0 0.0
    %130 = vmatprep.subr.mxu0 0.0
    %131 = vmatpush2.msra.mxu0 0.0
    %132 = vmatprep.subr.mxu0 0.0
    %133 = vmatpush2.msra.mxu0 0.0
    %134 = vmatprep.subr.mxu0 0.0
    %135 = vmatpush2.msra.mxu0 0.0
    %136 = vmatprep.subr.mxu0 0.0
    %137 = vmatpush2.msra.mxu0 0.0
    %138 = vmatprep.subr.mxu0 0.0
    %139 = vmatpush2.msra.mxu0 0.0
    %140 = vmatprep.subr.mxu0 0.0
    %141 = vmatpush2.msra.mxu0 0.0
    %142 = vmatprep.subr.mxu0 0.0
    %143 = vmatpush2.msra.mxu0 0.0
    %144 = vmatprep.subr.mxu0 0.0
    %145 = vmatpush2.msra.mxu0 0.0
    %146 = vmatprep.subr.mxu0 0.0
    %147 = vmatpush2.msra.mxu0 0.0
    %148 = vmatprep.subr.mxu0 0.0
    %149 = vmatpush2.msra.mxu0 0.0
    %150 = vmatprep.subr.mxu0 0.0
    %151 = vmatpush2.msra.mxu0 0.0
    %152 = vmatprep.subr.mxu0 0.0
    %153 = vmatpush2.msra.mxu0 0.0
    %154 = vmatprep.subr.mxu0 0.0
    %155 = vmatpush2.msra.mxu0 0.0
    %156 = vmatprep.mubr.f32.mxu0 0.0
    %157 = vmatmul.mubr.f32.gmra.mxu0 %v59
    %v158 = vpop.f32.mrf.mxu0
    %v159 = vadd.f32 0.0, %v158
    %v160 = vpop.f32.mrf.mxu0
    %161 = vmatprep.mubr.f32.mxu0 0.0
    %162 = vmatmul.mubr.f32.gmra.mxu0 %v60
    %v163 = vpop.f32.mrf.mxu0
    %v164 = vadd.f32 0.0, %v163
    %v165 = vpop.f32.mrf.mxu0
    %166 = vmatprep.mubr.f32.mxu0 0.0
    %167 = vmatmul.mubr.f32.gmra.mxu0 %v61
    %v168 = vpop.f32.mrf.mxu0
    %v169 = vadd.f32 0.0, %v168
    %v170 = vpop.f32.mrf.mxu0
    %171 = vmatprep.mubr.f32.mxu0 0.0
    %172 = vmatmul.mubr.f32.gmra.mxu0 %v62
    %v173 = vpop.f32.mrf.mxu0
    %v174 = vadd.f32 0.0, %v173
    %v175 = vpop.f32.mrf.mxu0
    %176 = vmatprep.mubr.f32.mxu0 0.0
    %177 = vmatmul.mubr.f32.gmra.mxu0 %v63
    %v178 = vpop.f32.mrf.mxu0
    %v179 = vadd.f32 0.0, %v178
    %v180 = vpop.f32.mrf.mxu0
    %181 = vmatprep.mubr.f32.mxu0 0.0
    %182 = vmatmul.mubr.f32.gmra.mxu0 %v64
    %v183 = vpop.f32.mrf.mxu0
    %v184 = vadd.f32 0.0, %v183
    %v185 = vpop.f32.mrf.mxu0
    %186 = vmatprep.mubr.f32.mxu0 0.0
    %187 = vmatmul.mubr.f32.gmra.mxu0 %v65
    %v188 = vpop.f32.mrf.mxu0
    %v189 = vadd.f32 0.0, %v188
    %v190 = vpop.f32.mrf.mxu0
    %191 = vmatprep.mubr.f32.mxu0 0.0
    %192 = vmatmul.mubr.f32.gmra.mxu0 %v66
    %v193 = vpop.f32.mrf.mxu0
    %v194 = vadd.f32 0.0, %v193
    %v195 = vpop.f32.mrf.mxu0
    %196 = vmatprep.mubr.f32.mxu0 0.0
    %197 = vmatmul.mubr.f32.gmra.mxu0 %v67
    %v198 = vpop.f32.mrf.mxu0
    %v199 = vadd.f32 0.0, %v198
    %v200 = vpop.f32.mrf.mxu0
    %201 = vmatprep.mubr.f32.mxu0 0.0
    %202 = vmatmul.mubr.f32.gmra.mxu0 %v68
    %v203 = vpop.f32.mrf.mxu0
    %v204 = vadd.f32 0.0, %v203
    %v205 = vpop.f32.mrf.mxu0
    %206 = vmatprep.mubr.f32.mxu0 0.0
    %207 = vmatmul.mubr.f32.gmra.mxu0 %v69
    %v208 = vpop.f32.mrf.mxu0
    %v209 = vadd.f32 0.0, %v208
    %v210 = vpop.f32.mrf.mxu0
    %211 = vmatprep.mubr.f32.mxu0 0.0
    %212 = vmatmul.mubr.f32.gmra.mxu0 %v70
    %v213 = vpop.f32.mrf.mxu0
    %v214 = vadd.f32 0.0, %v213
    %v215 = vpop.f32.mrf.mxu0
    %216 = vmatprep.mubr.f32.mxu0 0.0
    %217 = vmatmul.mubr.f32.gmra.mxu0 %v71
    %v218 = vpop.f32.mrf.mxu0
    %v219 = vadd.f32 0.0, %v218
    %v220 = vpop.f32.mrf.mxu0
    %221 = vmatprep.mubr.f32.mxu0 0.0
    %222 = vmatmul.mubr.f32.gmra.mxu0 %v72
    %v223 = vpop.f32.mrf.mxu0
    %v224 = vadd.f32 0.0, %v223
    %v225 = vpop.f32.mrf.mxu0
    %226 = vmatprep.mubr.f32.mxu0 0.0
    %227 = vmatmul.mubr.f32.gmra.mxu0 %v73
    %v228 = vpop.f32.mrf.mxu0
    %v229 = vadd.f32 0.0, %v228
    %v230 = vpop.f32.mrf.mxu0
    %231 = vmatprep.mubr.f32.mxu0 0.0
    %232 = vmatmul.mubr.f32.gmra.mxu0 %v74
    %v233 = vpop.f32.mrf.mxu0
    %v234 = vadd.f32 0.0, %v233
    %v235 = vpop.f32.mrf.mxu0
    %236 = vdwg.mxu0
    %v237 = vadd.f32 %v159, %v164
    %v238 = vadd.f32 %v237, %v169
    %v239 = vadd.f32 %v238, %v174
    %v240 = vadd.f32 %v239, %v179
    %v241 = vadd.f32 %v240, %v184
    %v242 = vadd.f32 %v241, %v189
    %v243 = vadd.f32 %v242, %v194
    %v244 = vadd.f32 %v243, %v199
    %v245 = vadd.f32 %v244, %v204
    %v246 = vadd.f32 %v245, %v209
    %v247 = vadd.f32 %v246, %v214
    %v248 = vadd.f32 %v247, %v219
    %v249 = vadd.f32 %v248, %v224
    %v250 = vadd.f32 %v249, %v229
    %v251 = vadd.f32 %v250, %v234
    %v252 = vrot.slane %v251, 4
    %v253 = vadd.f32 %v251, %v252
    %v254 = vrot.slane %v253, 2
    %v255 = vadd.f32 %v253, %v254
    %v256 = vrot.slane %v255, 1
    %v257 = vadd.f32 %v255, %v256
    %v258 = vmul.f32 %v257, 0.0078125
    %v259 = vsub.f32 %v159, %v258
    %v260 = vsub.f32 %v164, %v258
    %v261 = vsub.f32 %v169, %v258
    %v262 = vsub.f32 %v174, %v258
    %v263 = vsub.f32 %v179, %v258
    %v264 = vsub.f32 %v184, %v258
    %v265 = vsub.f32 %v189, %v258
    %v266 = vsub.f32 %v194, %v258
    %v267 = vsub.f32 %v199, %v258
    %v268 = vsub.f32 %v204, %v258
    %v269 = vsub.f32 %v209, %v258
    %v270 = vsub.f32 %v214, %v258
    %v271 = vsub.f32 %v219, %v258
    %v272 = vsub.f32 %v224, %v258
    %v273 = vsub.f32 %v229, %v258
    %v274 = vsub.f32 %v234, %v258
    %v275 = vmul.f32 %v259, %v259
    %v276 = vmul.f32 %v260, %v260
    %v277 = vmul.f32 %v261, %v261
    %v278 = vmul.f32 %v262, %v262
    %v279 = vmul.f32 %v263, %v263
    %v280 = vmul.f32 %v264, %v264
    %v281 = vmul.f32 %v265, %v265
    %v282 = vmul.f32 %v266, %v266
    %v283 = vmul.f32 %v267, %v267
    %v284 = vmul.f32 %v268, %v268
    %v285 = vmul.f32 %v269, %v269
    %v286 = vmul.f32 %v270, %v270
    %v287 = vmul.f32 %v271, %v271
    %v288 = vmul.f32 %v272, %v272
    %v289 = vmul.f32 %v273, %v273
    %v290 = vmul.f32 %v274, %v274
    %v291 = vadd.f32 %v275, %v276
    %v292 = vadd.f32 %v291, %v277
    %v293 = vadd.f32 %v292, %v278
    %v294 = vadd.f32 %v293, %v279
    %v295 = vadd.f32 %v294, %v280
    %v296 = vadd.f32 %v295, %v281
    %v297 = vadd.f32 %v296, %v282
    %v298 = vadd.f32 %v297, %v283
    %v299 = vadd.f32 %v298, %v284
    %v300 = vadd.f32 %v299, %v285
    %v301 = vadd.f32 %v300, %v286
    %v302 = vadd.f32 %v301, %v287
    %v303 = vadd.f32 %v302, %v288
    %v304 = vadd.f32 %v303, %v289
    %v305 = vadd.f32 %v304, %v290
    %v306 = vrot.slane %v305, 4
    %v307 = vadd.f32 %v305, %v306
    %v308 = vrot.slane %v307, 2
    %v309 = vadd.f32 %v307, %v308
    %v310 = vrot.slane %v309, 1
    %v311 = vadd.f32 %v309, %v310
    %v312 = vmul.f32 %v311, 0.0078125
    %v313 = vadd.f32 %v312, 1e-05
    %v314 = vrsqrt.pop %v313
    %v315 = vmul.f32 %v75, %v314
    %v316 = vlaneseq
    %v317 = vshrl.u32 %v316, 7
    %v318 = vsub.s32 0, %v317
    %v319 = vrot.slane %v315, %v318
    %v320 = vmul.f32 %v259, %v319
    %v321 = vmul.f32 %v260, %v319
    %v322 = vmul.f32 %v261, %v319
    %v323 = vmul.f32 %v262, %v319
    %v324 = vmul.f32 %v263, %v319
    %v325 = vmul.f32 %v264, %v319
    %v326 = vmul.f32 %v265, %v319
    %v327 = vmul.f32 %v266, %v319
    %v328 = vmul.f32 %v267, %v319
    %v329 = vmul.f32 %v268, %v319
    %v330 = vmul.f32 %v269, %v319
    %v331 = vmul.f32 %v270, %v319
    %v332 = vmul.f32 %v271, %v319
    %v333 = vmul.f32 %v272, %v319
    %v334 = vmul.f32 %v273, %v319
    %v335 = vmul.f32 %v274, %v319
    %v336 = vlaneseq
    %v337 = vshrl.u32 %v336, 7
    %v338 = vsub.s32 1, %v337
    %v339 = vrot.slane %v75, %v338
    %v340 = vadd.f32 %v320, %v339
    %v341 = vadd.f32 %v321, %v339
    %v342 = vadd.f32 %v322, %v339
    %v343 = vadd.f32 %v323, %v339
    %v344 = vadd.f32 %v324, %v339
    %v345 = vadd.f32 %v325, %v339
    %v346 = vadd.f32 %v326, %v339
    %v347 = vadd.f32 %v327, %v339
    %v348 = vadd.f32 %v328, %v339
    %v349 = vadd.f32 %v329, %v339
    %v350 = vadd.f32 %v330, %v339
    %v351 = vadd.f32 %v331, %v339
    %v352 = vadd.f32 %v332, %v339
    %v353 = vadd.f32 %v333, %v339
    %v354 = vadd.f32 %v334, %v339
    %v355 = vadd.f32 %v335, %v339
    %v356 = vmax.f32 %v340, 0.0
    %v357 = vmax.f32 %v341, 0.0
    %v358 = vmax.f32 %v342, 0.0
    %v359 = vmax.f32 %v343, 0.0
    %v360 = vmax.f32 %v344, 0.0
    %v361 = vmax.f32 %v345, 0.0
    %v362 = vmax.f32 %v346, 0.0
    %v363 = vmax.f32 %v347, 0.0
    %v364 = vmax.f32 %v348, 0.0
    %v365 = vmax.f32 %v349, 0.0
    %v366 = vmax.f32 %v350, 0.0
    %v367 = vmax.f32 %v351, 0.0
    %v368 = vmax.f32 %v352, 0.0
    %v369 = vmax.f32 %v353, 0.0
    %v370 = vmax.f32 %v354, 0.0
    %v371 = vmax.f32 %v355, 0.0
    %v372 = vld [vmem:[#allocation7] sm:$0xff]
    %v373 = vld [vmem:[#allocation7 + $0x8] sm:$0xff]
    %v374 = vld [vmem:[#allocation7 + $0x10] sm:$0xff]
    %v375 = vld [vmem:[#allocation7 + $0x18] sm:$0xff]
    %v376 = vld [vmem:[#allocation7 + $0x20] sm:$0xff]
    %v377 = vld [vmem:[#allocation7 + $0x28] sm:$0xff]
    %v378 = vld [vmem:[#allocation7 + $0x30] sm:$0xff]
    %v379 = vld [vmem:[#allocation7 + $0x38] sm:$0xff]
    %v380 = vld [vmem:[#allocation7 + $0x40] sm:$0xff]
    %v381 = vld [vmem:[#allocation7 + $0x48] sm:$0xff]
    %v382 = vld [vmem:[#allocation7 + $0x50] sm:$0xff]
    %v383 = vld [vmem:[#allocation7 + $0x58] sm:$0xff]
    %v384 = vld [vmem:[#allocation7 + $0x60] sm:$0xff]
    %v385 = vld [vmem:[#allocation7 + $0x68] sm:$0xff]
    %v386 = vld [vmem:[#allocation7 + $0x70] sm:$0xff]
    %v387 = vld [vmem:[#allocation7 + $0x78] sm:$0xff]
    %388 = vmatprep.subr.mxu0 0.0
    %389 = vmatpush1.msra.mxu0 %v387
    %390 = vmatprep.subr.mxu0 0.0
    %391 = vmatpush1.msra.mxu0 %v386
    %392 = vmatprep.subr.mxu0 0.0
    %393 = vmatpush1.msra.mxu0 %v385
    %394 = vmatprep.subr.mxu0 0.0
    %395 = vmatpush1.msra.mxu0 %v384
    %396 = vmatprep.subr.mxu0 0.0
    %397 = vmatpush1.msra.mxu0 %v383
    %398 = vmatprep.subr.mxu0 0.0
    %399 = vmatpush1.msra.mxu0 %v382
    %400 = vmatprep.subr.mxu0 0.0
    %401 = vmatpush1.msra.mxu0 %v381
    %402 = vmatprep.subr.mxu0 0.0
    %403 = vmatpush1.msra.mxu0 %v380
    %404 = vmatprep.subr.mxu0 0.0
    %405 = vmatpush1.msra.mxu0 %v379
    %406 = vmatprep.subr.mxu0 0.0
    %407 = vmatpush1.msra.mxu0 %v378
    %408 = vmatprep.subr.mxu0 0.0
    %409 = vmatpush1.msra.mxu0 %v377
    %410 = vmatprep.subr.mxu0 0.0
    %411 = vmatpush1.msra.mxu0 %v376
    %412 = vmatprep.subr.mxu0 0.0
    %413 = vmatpush1.msra.mxu0 %v375
    %414 = vmatprep.subr.mxu0 0.0
    %415 = vmatpush1.msra.mxu0 %v374
    %416 = vmatprep.subr.mxu0 0.0
    %417 = vmatpush1.msra.mxu0 %v373
    %418 = vmatprep.subr.mxu0 0.0
    %419 = vmatpush1.msra.mxu0 %v372
    %420 = vmatprep.subr.mxu0 0.0
    %421 = vmatpush2.msra.mxu0 0.0
    %422 = vmatprep.subr.mxu0 0.0
    %423 = vmatpush2.msra.mxu0 0.0
    %424 = vmatprep.subr.mxu0 0.0
    %425 = vmatpush2.msra.mxu0 0.0
    %426 = vmatprep.subr.mxu0 0.0
    %427 = vmatpush2.msra.mxu0 0.0
    %428 = vmatprep.subr.mxu0 0.0
    %429 = vmatpush2.msra.mxu0 0.0
    %430 = vmatprep.subr.mxu0 0.0
    %431 = vmatpush2.msra.mxu0 0.0
    %432 = vmatprep.subr.mxu0 0.0
    %433 = vmatpush2.msra.mxu0 0.0
    %434 = vmatprep.subr.mxu0 0.0
    %435 = vmatpush2.msra.mxu0 0.0
    %436 = vmatprep.subr.mxu0 0.0
    %437 = vmatpush2.msra.mxu0 0.0
    %438 = vmatprep.subr.mxu0 0.0
    %439 = vmatpush2.msra.mxu0 0.0
    %440 = vmatprep.subr.mxu0 0.0
    %441 = vmatpush2.msra.mxu0 0.0
    %442 = vmatprep.subr.mxu0 0.0
    %443 = vmatpush2.msra.mxu0 0.0
    %444 = vmatprep.subr.mxu0 0.0
    %445 = vmatpush2.msra.mxu0 0.0
    %446 = vmatprep.subr.mxu0 0.0
    %447 = vmatpush2.msra.mxu0 0.0
    %448 = vmatprep.subr.mxu0 0.0
    %449 = vmatpush2.msra.mxu0 0.0
    %450 = vmatprep.subr.mxu0 0.0
    %451 = vmatpush2.msra.mxu0 0.0
    %452 = vmatprep.mubr.f32.mxu0 0.0
    %453 = vmatmul.mubr.f32.gmra.mxu0 %v356
    %v454 = vpop.f32.mrf.mxu0
    %v455 = vadd.f32 0.0, %v454
    %v456 = vpop.f32.mrf.mxu0
    %457 = vmatprep.mubr.f32.mxu0 0.0
    %458 = vmatmul.mubr.f32.gmra.mxu0 %v357
    %v459 = vpop.f32.mrf.mxu0
    %v460 = vadd.f32 0.0, %v459
    %v461 = vpop.f32.mrf.mxu0
    %462 = vmatprep.mubr.f32.mxu0 0.0
    %463 = vmatmul.mubr.f32.gmra.mxu0 %v358
    %v464 = vpop.f32.mrf.mxu0
    %v465 = vadd.f32 0.0, %v464
    %v466 = vpop.f32.mrf.mxu0
    %467 = vmatprep.mubr.f32.mxu0 0.0
    %468 = vmatmul.mubr.f32.gmra.mxu0 %v359
    %v469 = vpop.f32.mrf.mxu0
    %v470 = vadd.f32 0.0, %v469
    %v471 = vpop.f32.mrf.mxu0
    %472 = vmatprep.mubr.f32.mxu0 0.0
    %473 = vmatmul.mubr.f32.gmra.mxu0 %v360
    %v474 = vpop.f32.mrf.mxu0
    %v475 = vadd.f32 0.0, %v474
    %v476 = vpop.f32.mrf.mxu0
    %477 = vmatprep.mubr.f32.mxu0 0.0
    %478 = vmatmul.mubr.f32.gmra.mxu0 %v361
    %v479 = vpop.f32.mrf.mxu0
    %v480 = vadd.f32 0.0, %v479
    %v481 = vpop.f32.mrf.mxu0
    %482 = vmatprep.mubr.f32.mxu0 0.0
    %483 = vmatmul.mubr.f32.gmra.mxu0 %v362
    %v484 = vpop.f32.mrf.mxu0
    %v485 = vadd.f32 0.0, %v484
    %v486 = vpop.f32.mrf.mxu0
    %487 = vmatprep.mubr.f32.mxu0 0.0
    %488 = vmatmul.mubr.f32.gmra.mxu0 %v363
    %v489 = vpop.f32.mrf.mxu0
    %v490 = vadd.f32 0.0, %v489
    %v491 = vpop.f32.mrf.mxu0
    %492 = vmatprep.mubr.f32.mxu0 0.0
    %493 = vmatmul.mubr.f32.gmra.mxu0 %v364
    %v494 = vpop.f32.mrf.mxu0
    %v495 = vadd.f32 0.0, %v494
    %v496 = vpop.f32.mrf.mxu0
    %497 = vmatprep.mubr.f32.mxu0 0.0
    %498 = vmatmul.mubr.f32.gmra.mxu0 %v365
    %v499 = vpop.f32.mrf.mxu0
    %v500 = vadd.f32 0.0, %v499
    %v501 = vpop.f32.mrf.mxu0
    %502 = vmatprep.mubr.f32.mxu0 0.0
    %503 = vmatmul.mubr.f32.gmra.mxu0 %v366
    %v504 = vpop.f32.mrf.mxu0
    %v505 = vadd.f32 0.0, %v504
    %v506 = vpop.f32.mrf.mxu0
    %507 = vmatprep.mubr.f32.mxu0 0.0
    %508 = vmatmul.mubr.f32.gmra.mxu0 %v367
    %v509 = vpop.f32.mrf.mxu0
    %v510 = vadd.f32 0.0, %v509
    %v511 = vpop.f32.mrf.mxu0
    %512 = vmatprep.mubr.f32.mxu0 0.0
    %513 = vmatmul.mubr.f32.gmra.mxu0 %v368
    %v514 = vpop.f32.mrf.mxu0
    %v515 = vadd.f32 0.0, %v514
    %v516 = vpop.f32.mrf.mxu0
    %517 = vmatprep.mubr.f32.mxu0 0.0
    %518 = vmatmul.mubr.f32.gmra.mxu0 %v369
    %v519 = vpop.f32.mrf.mxu0
    %v520 = vadd.f32 0.0, %v519
    %v521 = vpop.f32.mrf.mxu0
    %522 = vmatprep.mubr.f32.mxu0 0.0
    %523 = vmatmul.mubr.f32.gmra.mxu0 %v370
    %v524 = vpop.f32.mrf.mxu0
    %v525 = vadd.f32 0.0, %v524
    %v526 = vpop.f32.mrf.mxu0
    %527 = vmatprep.mubr.f32.mxu0 0.0
    %528 = vmatmul.mubr.f32.gmra.mxu0 %v371
    %v529 = vpop.f32.mrf.mxu0
    %v530 = vadd.f32 0.0, %v529
    %v531 = vpop.f32.mrf.mxu0
    %532 = vdwg.mxu0
    %v533 = vadd.f32 %v455, %v460
    %v534 = vadd.f32 %v533, %v465
    %v535 = vadd.f32 %v534, %v470
    %v536 = vadd.f32 %v535, %v475
    %v537 = vadd.f32 %v536, %v480
    %v538 = vadd.f32 %v537, %v485
    %v539 = vadd.f32 %v538, %v490
    %v540 = vadd.f32 %v539, %v495
    %v541 = vadd.f32 %v540, %v500
    %v542 = vadd.f32 %v541, %v505
    %v543 = vadd.f32 %v542, %v510
    %v544 = vadd.f32 %v543, %v515
    %v545 = vadd.f32 %v544, %v520
    %v546 = vadd.f32 %v545, %v525
    %v547 = vadd.f32 %v546, %v530
    %v548 = vrot.slane %v547, 4
    %v549 = vadd.f32 %v547, %v548
    %v550 = vrot.slane %v549, 2
    %v551 = vadd.f32 %v549, %v550
    %v552 = vrot.slane %v551, 1
    %v553 = vadd.f32 %v551, %v552
    %v554 = vmul.f32 %v553, 0.0078125
    %v555 = vsub.f32 %v455, %v554
    %v556 = vsub.f32 %v460, %v554
    %v557 = vsub.f32 %v465, %v554
    %v558 = vsub.f32 %v470, %v554
    %v559 = vsub.f32 %v475, %v554
    %v560 = vsub.f32 %v480, %v554
    %v561 = vsub.f32 %v485, %v554
    %v562 = vsub.f32 %v490, %v554
    %v563 = vsub.f32 %v495, %v554
    %v564 = vsub.f32 %v500, %v554
    %v565 = vsub.f32 %v505, %v554
    %v566 = vsub.f32 %v510, %v554
    %v567 = vsub.f32 %v515, %v554
    %v568 = vsub.f32 %v520, %v554
    %v569 = vsub.f32 %v525, %v554
    %v570 = vsub.f32 %v530, %v554
    %v571 = vmul.f32 %v555, %v555
    %v572 = vmul.f32 %v556, %v556
    %v573 = vmul.f32 %v557, %v557
    %v574 = vmul.f32 %v558, %v558
    %v575 = vmul.f32 %v559, %v559
    %v576 = vmul.f32 %v560, %v560
    %v577 = vmul.f32 %v561, %v561
    %v578 = vmul.f32 %v562, %v562
    %v579 = vmul.f32 %v563, %v563
    %v580 = vmul.f32 %v564, %v564
    %v581 = vmul.f32 %v565, %v565
    %v582 = vmul.f32 %v566, %v566
    %v583 = vmul.f32 %v567, %v567
    %v584 = vmul.f32 %v568, %v568
    %v585 = vmul.f32 %v569, %v569
    %v586 = vmul.f32 %v570, %v570
    %v587 = vadd.f32 %v571, %v572
    %v588 = vadd.f32 %v587, %v573
    %v589 = vadd.f32 %v588, %v574
    %v590 = vadd.f32 %v589, %v575
    %v591 = vadd.f32 %v590, %v576
    %v592 = vadd.f32 %v591, %v577
    %v593 = vadd.f32 %v592, %v578
    %v594 = vadd.f32 %v593, %v579
    %v595 = vadd.f32 %v594, %v580
    %v596 = vadd.f32 %v595, %v581
    %v597 = vadd.f32 %v596, %v582
    %v598 = vadd.f32 %v597, %v583
    %v599 = vadd.f32 %v598, %v584
    %v600 = vadd.f32 %v599, %v585
    %v601 = vadd.f32 %v600, %v586
    %v602 = vrot.slane %v601, 4
    %v603 = vadd.f32 %v601, %v602
    %v604 = vrot.slane %v603, 2
    %v605 = vadd.f32 %v603, %v604
    %v606 = vrot.slane %v605, 1
    %v607 = vadd.f32 %v605, %v606
    %v608 = vmul.f32 %v607, 0.0078125
    %v609 = vadd.f32 %v608, 1e-05
    %v610 = vrsqrt.pop %v609
    %v611 = vmul.f32 %v75, %v610
    %v612 = vlaneseq
    %v613 = vshrl.u32 %v612, 7
    %v614 = vsub.s32 2, %v613
    %v615 = vrot.slane %v611, %v614
    %v616 = vmul.f32 %v555, %v615
    %v617 = vmul.f32 %v556, %v615
    %v618 = vmul.f32 %v557, %v615
    %v619 = vmul.f32 %v558, %v615
    %v620 = vmul.f32 %v559, %v615
    %v621 = vmul.f32 %v560, %v615
    %v622 = vmul.f32 %v561, %v615
    %v623 = vmul.f32 %v562, %v615
    %v624 = vmul.f32 %v563, %v615
    %v625 = vmul.f32 %v564, %v615
    %v626 = vmul.f32 %v565, %v615
    %v627 = vmul.f32 %v566, %v615
    %v628 = vmul.f32 %v567, %v615
    %v629 = vmul.f32 %v568, %v615
    %v630 = vmul.f32 %v569, %v615
    %v631 = vmul.f32 %v570, %v615
    %v632 = vlaneseq
    %v633 = vshrl.u32 %v632, 7
    %v634 = vsub.s32 3, %v633
    %v635 = vrot.slane %v75, %v634
    %v636 = vadd.f32 %v616, %v635
    %v637 = vadd.f32 %v617, %v635
    %v638 = vadd.f32 %v618, %v635
    %v639 = vadd.f32 %v619, %v635
    %v640 = vadd.f32 %v620, %v635
    %v641 = vadd.f32 %v621, %v635
    %v642 = vadd.f32 %v622, %v635
    %v643 = vadd.f32 %v623, %v635
    %v644 = vadd.f32 %v624, %v635
    %v645 = vadd.f32 %v625, %v635
    %v646 = vadd.f32 %v626, %v635
    %v647 = vadd.f32 %v627, %v635
    %v648 = vadd.f32 %v628, %v635
    %v649 = vadd.f32 %v629, %v635
    %v650 = vadd.f32 %v630, %v635
    %v651 = vadd.f32 %v631, %v635
    %v652 = vmax.f32 %v636, 0.0
    %v653 = vmax.f32 %v637, 0.0
    %v654 = vmax.f32 %v638, 0.0
    %v655 = vmax.f32 %v639, 0.0
    %v656 = vmax.f32 %v640, 0.0
    %v657 = vmax.f32 %v641, 0.0
    %v658 = vmax.f32 %v642, 0.0
    %v659 = vmax.f32 %v643, 0.0
    %v660 = vmax.f32 %v644, 0.0
    %v661 = vmax.f32 %v645, 0.0
    %v662 = vmax.f32 %v646, 0.0
    %v663 = vmax.f32 %v647, 0.0
    %v664 = vmax.f32 %v648, 0.0
    %v665 = vmax.f32 %v649, 0.0
    %v666 = vmax.f32 %v650, 0.0
    %v667 = vmax.f32 %v651, 0.0
    %v668 = vadd.f32 %v652, %v59
    %v669 = vadd.f32 %v653, %v60
    %v670 = vadd.f32 %v654, %v61
    %v671 = vadd.f32 %v655, %v62
    %v672 = vadd.f32 %v656, %v63
    %v673 = vadd.f32 %v657, %v64
    %v674 = vadd.f32 %v658, %v65
    %v675 = vadd.f32 %v659, %v66
    %v676 = vadd.f32 %v660, %v67
    %v677 = vadd.f32 %v661, %v68
    %v678 = vadd.f32 %v662, %v69
    %v679 = vadd.f32 %v663, %v70
    %v680 = vadd.f32 %v664, %v71
    %v681 = vadd.f32 %v665, %v72
    %v682 = vadd.f32 %v666, %v73
    %v683 = vadd.f32 %v667, %v74
    %v684 = vmax.f32 %v668, 0.0
    %v685 = vmax.f32 %v669, 0.0
    %v686 = vmax.f32 %v670, 0.0
    %v687 = vmax.f32 %v671, 0.0
    %v688 = vmax.f32 %v672, 0.0
    %v689 = vmax.f32 %v673, 0.0
    %v690 = vmax.f32 %v674, 0.0
    %v691 = vmax.f32 %v675, 0.0
    %v692 = vmax.f32 %v676, 0.0
    %v693 = vmax.f32 %v677, 0.0
    %v694 = vmax.f32 %v678, 0.0
    %v695 = vmax.f32 %v679, 0.0
    %v696 = vmax.f32 %v680, 0.0
    %v697 = vmax.f32 %v681, 0.0
    %v698 = vmax.f32 %v682, 0.0
    %v699 = vmax.f32 %v683, 0.0
    %700 = vst [vmem:[#allocation8] sm:$0xff] %v684
    %701 = vst [vmem:[#allocation8 + $0x8] sm:$0xff] %v685
    %702 = vst [vmem:[#allocation8 + $0x10] sm:$0xff] %v686
    %703 = vst [vmem:[#allocation8 + $0x18] sm:$0xff] %v687
    %704 = vst [vmem:[#allocation8 + $0x20] sm:$0xff] %v688
    %705 = vst [vmem:[#allocation8 + $0x28] sm:$0xff] %v689
    %706 = vst [vmem:[#allocation8 + $0x30] sm:$0xff] %v690
    %707 = vst [vmem:[#allocation8 + $0x38] sm:$0xff] %v691
    %708 = vst [vmem:[#allocation8 + $0x40] sm:$0xff] %v692
    %709 = vst [vmem:[#allocation8 + $0x48] sm:$0xff] %v693
    %710 = vst [vmem:[#allocation8 + $0x50] sm:$0xff] %v694
    %711 = vst [vmem:[#allocation8 + $0x58] sm:$0xff] %v695
    %712 = vst [vmem:[#allocation8 + $0x60] sm:$0xff] %v696
    %713 = vst [vmem:[#allocation8 + $0x68] sm:$0xff] %v697
    %714 = vst [vmem:[#allocation8 + $0x70] sm:$0xff] %v698
    %715 = vst [vmem:[#allocation8 + $0x78] sm:$0xff] %v699
    // Predicated region
    $region30: #{tpu_custom_call.1} parent=1 // pred_check
      _
    $region31: #{tpu_custom_call.1} parent=1 // pred_check_branch
      %717 = sbr.rel (0) target = $region33
    $region32: #{tpu_custom_call.1} parent=1 // pred_region
      %s719 = ssub.s32 2048, 2048
      %720 = vsyncadd [#allocation4], %s719
      %s721 = sshll.u32 [#allocation8], 4
      %s722 = int_to_ptr.vmem [resolvable:$true] %s721
      %727 = dma.vmem_to_hbm [thread:$0]  %s722, 2048, %s4, [#allocation4], 128, 128, 8
    $region33: #{tpu_custom_call.1} parent=1 // pred_fallthru
      _
    // Predicated region
    $region34: #{tpu_custom_call.1} parent=1 // pred_check
      _
    $region35: #{tpu_custom_call.1} parent=1 // pred_check_branch
      %729 = sbr.rel (0) target = $region37
    $region36: #{tpu_custom_call.1} parent=1 // pred_region
      %730 = dma.done [#allocation4], 2048
    $region37: #{tpu_custom_call.1} parent=1 // pred_fallthru
      _
    %731 = vsyncpa [#allocation3], 1
    %732 = vsyncpa [#allocation6], 1
    %733 = vsyncpa [#allocation4], 1

</llo_original>
